<compile_context>
chip_gen: v7x
topology: tpu7x:2x2x1
jax: 0.10.0
libtpu: 0.0.40
codegen_flags: <defaults>
</compile_context>

<pallas_src>
import functools

import numpy as np

import jax
import jax.numpy as jnp
from jax.experimental import pallas as pl
from jax.experimental.pallas import tpu as pltpu


def _harmonic_kernel(x_ref, o_ref, *scratch, dim, n, out_dim, out_pad, freqs,
                     use_recurrence, omega0, append_input, transposed_output):
    """Hot path.

    x_ref : (dim, TR)      f32, rows on the 128-lane axis.
    o_ref : (TR, out_dim)  natural layout (default)  -- written via in-kernel transpose
            (out_dim, TR)  lane-dense     (transposed_output=True) -- written directly
    scratch[0] : (out_pad, TR) f32 staging buffer (default mode only).
    """
    stage = o_ref if transposed_output else scratch[0]

    x = x_ref[...]                                   # (dim, TR) f32

    def put(row, val):                               # static-offset single-row store
        stage[row:row + 1, :] = val.astype(stage.dtype)

    if use_recurrence:
        # logspace: freqs are omega0 * 2**k  ->  double-angle recurrence.
        # Only 2*dim transcendentals per tile row instead of 2*dim*n.
        s = jnp.sin(x * omega0)                      # (dim, TR)
        c = jnp.cos(x * omega0)
        for k in range(n):
            if k:
                s, c = 2.0 * s * c, (c - s) * (c + s)
            for d in range(dim):
                put(d * n + k, s[d:d + 1, :])
                put(dim * n + d * n + k, c[d:d + 1, :])
    else:
        # linspace: per-frequency Python float scalar (no captured array constants).
        for k in range(n):
            xf = x * freqs[k]
            s = jnp.sin(xf)
            c = jnp.cos(xf)
            for d in range(dim):
                put(d * n + k, s[d:d + 1, :])
                put(dim * n + d * n + k, c[d:d + 1, :])

    if append_input:
        stage[2 * dim * n:2 * dim * n + dim, :] = x.astype(stage.dtype)

    if not transposed_output:
        # Zero the (<8) sublane pad rows so the transpose reads defined data.
        if out_pad > out_dim:
            stage[out_dim:out_pad, :] = jnp.zeros(
                (out_pad - out_dim, stage.shape[1]), jnp.float32)
        emb_t = stage[...]                           # (out_pad, TR) f32
        emb = jnp.transpose(emb_t, (1, 0))           # XLU transpose -> (TR, out_pad)
        o_ref[...] = emb[:, :out_dim].astype(o_ref.dtype)


def harmonic_embedding(x, *, n_harmonic_functions=6, omega_0=1.0, logspace=True,
                       append_input=True, row_tile=16384, out_dtype=jnp.float32,
                       transposed_output=False):
    """JAX wrapper reproducing HarmonicEmbedding.forward semantics.

    row_tile          : rows of the flattened batch per grid step (rounded to a
                        multiple of 128, capped so big inputs get >= ~8 grid steps).
    out_dtype         : output dtype (math is f32; cast at the store).  Use
                        jnp.bfloat16 to halve the dominant HBM writeback.
    transposed_output : if True, return the lane-dense [out_dim, prod(lead)] layout
                        (no transpose anywhere); default False returns the PyTorch
                        [..., out_dim] layout via an in-kernel XLU transpose.
    """
    x = jnp.asarray(x, jnp.float32)
    *lead, dim = x.shape
    rows = 1
    for s_ in lead:
        rows *= int(s_)
    n = int(n_harmonic_functions)
    out_dim = dim * (2 * n + int(append_input))
    out_pad = ((out_dim + 7) // 8) * 8

    # Static frequencies as Python floats (baked into the kernel as scalar immediates).
    if logspace:
        base = [2.0 ** k for k in range(n)]
    else:
        base = [float(v) for v in
                np.linspace(1.0, 2.0 ** (n - 1), n, dtype=np.float32)]
    freqs = tuple(float(omega_0) * b for b in base)

    # Rows on the 128-lane axis for the kernel (input bytes are tiny vs output).
    x_t = x.reshape(rows, dim).T                      # (dim, rows)

    # Lane tile: multiple of 128; capped so large inputs still get >= ~8 grid steps.
    tr = max(128, (int(row_tile) // 128) * 128)
    tr_cap = max(128, pl.cdiv(pl.cdiv(rows, 8), 128) * 128)
    tr = min(tr, tr_cap)
    grid = (pl.cdiv(rows, tr),)                       # partial last block: Pallas clips

    kernel = functools.partial(
        _harmonic_kernel, dim=dim, n=n, out_dim=out_dim, out_pad=out_pad,
        freqs=freqs, use_recurrence=bool(logspace), omega0=float(omega_0),
        append_input=bool(append_input), transposed_output=bool(transposed_output))

    out_bytes = int(rows) * out_dim * jnp.dtype(out_dtype).itemsize
    cost = pl.CostEstimate(
        flops=int(rows) * out_dim * 8,
        transcendentals=int(rows) * dim * (2 if logspace else 2 * n),
        bytes_accessed=int(rows) * dim * 4 + out_bytes)

    if transposed_output:
        out_shape = jax.ShapeDtypeStruct((out_dim, rows), out_dtype)
        out_specs = pl.BlockSpec((out_dim, tr), lambda i: (0, i))
        scratch_shapes = []
    else:
        out_shape = jax.ShapeDtypeStruct((rows, out_dim), out_dtype)
        out_specs = pl.BlockSpec((tr, out_dim), lambda i: (i, 0))
        scratch_shapes = [pltpu.VMEM((out_pad, tr), jnp.float32)]

    out = pl.pallas_call(
        kernel,
        out_shape=out_shape,
        grid_spec=pltpu.PrefetchScalarGridSpec(
            num_scalar_prefetch=0,
            grid=grid,
            in_specs=[
                # dim (=3) equals the full sublane extent -> full-dim block is legal.
                pl.BlockSpec((dim, tr), lambda i: (0, i)),
            ],
            out_specs=out_specs,
            scratch_shapes=scratch_shapes),
        compiler_params=pltpu.CompilerParams(
            dimension_semantics=("parallel",),        # megacore sharding on v7x
            vmem_limit_bytes=48 * 1024 * 1024),       # 16K-row natural-layout blocks
        cost_estimate=cost,
    )(x_t)

    if transposed_output:
        return out                                    # (out_dim, prod(lead))
    return out.reshape(*lead, out_dim)


def _reference(x, *, n_harmonic_functions=6, omega_0=1.0,
               logspace=True, append_input=True):
    """Pure-JAX reference matching the PyTorch forward exactly."""
    x = jnp.asarray(x, jnp.float32)
    if logspace:
        freqs = 2.0 ** jnp.arange(n_harmonic_functions, dtype=jnp.float32)
    else:
        freqs = jnp.linspace(1.0, 2.0 ** (n_harmonic_functions - 1),
                             n_harmonic_functions, dtype=jnp.float32)
    freqs = freqs * omega_0
    embed = (x[..., None] * freqs).reshape(*x.shape[:-1], -1)
    parts = (jnp.sin(embed), jnp.cos(embed), x) if append_input \
        else (jnp.sin(embed), jnp.cos(embed))
    return jnp.concatenate(parts, axis=-1)


if __name__ == "__main__":
    key = jax.random.PRNGKey(0)
    # [minibatch, n_points, xyz] — typical 3D positional-encoding input.
    x = jax.random.normal(key, (2, 16, 3), dtype=jnp.float32)

    out = jax.block_until_ready(
        harmonic_embedding(x, n_harmonic_functions=6, omega_0=1.0,
                           logspace=True, append_input=True))
    ref = _reference(x, n_harmonic_functions=6, omega_0=1.0,
                     logspace=True, append_input=True)
    assert out.shape == (2, 16, 3 * (2 * 6 + 1)), out.shape
    # Double-angle recurrence differs from direct sin/cos at the ~1e-5 level.
    assert jnp.allclose(out, ref, atol=1e-4, rtol=1e-4)

    # linspace / no-append / row count not a multiple of 8 (exercises block clipping).
    x2 = jax.random.normal(jax.random.PRNGKey(1), (5, 7, 3), dtype=jnp.float32)
    out2 = jax.block_until_ready(
        harmonic_embedding(x2, n_harmonic_functions=4, omega_0=0.5,
                           logspace=False, append_input=False))
    ref2 = _reference(x2, n_harmonic_functions=4, omega_0=0.5,
                      logspace=False, append_input=False)
    assert out2.shape == (5, 7, 3 * 2 * 4), out2.shape
    assert jnp.allclose(out2, ref2, atol=1e-5, rtol=1e-5)

    # Lane-dense transposed output path (no transpose anywhere in the pipeline).
    out3 = jax.block_until_ready(harmonic_embedding(x, transposed_output=True))
    ref3 = ref.reshape(-1, ref.shape[-1]).T
    assert out3.shape == (39, 32), out3.shape
    assert jnp.allclose(out3, ref3, atol=1e-4, rtol=1e-4)

    print("KERNEL_OK")
</pallas_src>

<mosaic_0001>
module attributes {stable_mosaic.version = 11 : i64} {
  func.func @_harmonic_kernel(%arg0: i32, %arg1: memref<3x128xf32, #tpu.memory_space<vmem>>, %arg2: memref<128x39xf32, #tpu.memory_space<vmem>>, %arg3: memref<40x128xf32, #tpu.memory_space<vmem>>) attributes {dimension_semantics = [#tpu.dimension_semantics<parallel>], iteration_bounds = array<i64: 1>, scalar_prefetch = 0 : i64, scratch_operands = 1 : i64, tpu.core_type = #tpu.core_type<tc>, window_params = [{transform_indices = @transform_0, window_bounds = array<i64: 3, 128>}, {transform_indices = @transform_1, window_bounds = array<i64: 128, 39>}]} {
    %c0 = arith.constant 0 : index
    %c0_0 = arith.constant 0 : index
    %0 = vector.load %arg1[%c0, %c0_0] : memref<3x128xf32, #tpu.memory_space<vmem>>, vector<3x128xf32>
    %cst = arith.constant 1.000000e+00 : f32
    %1 = vector.broadcast %cst : f32 to vector<3x128xf32>
    %2 = arith.mulf %0, %1 : vector<3x128xf32>
    %3 = math.sin %2 : vector<3x128xf32>
    %cst_1 = arith.constant 1.000000e+00 : f32
    %4 = vector.broadcast %cst_1 : f32 to vector<3x128xf32>
    %5 = arith.mulf %0, %4 : vector<3x128xf32>
    %6 = math.cos %5 : vector<3x128xf32>
    %7 = vector.extract_strided_slice %3 {offsets = [0, 0], sizes = [1, 128], strides = [1, 1]} : vector<3x128xf32> to vector<1x128xf32>
    %c0_2 = arith.constant 0 : index
    %c0_3 = arith.constant 0 : index
    %8 = vector.load %arg3[%c0_2, %c0_3] : memref<40x128xf32, #tpu.memory_space<vmem>>, vector<1x128xf32>
    tpu.vector_store %arg3[%c0_2, %c0_3], %7 {strides = array<i32>} : memref<40x128xf32, #tpu.memory_space<vmem>>, vector<1x128xf32>,
    %9 = vector.extract_strided_slice %6 {offsets = [0, 0], sizes = [1, 128], strides = [1, 1]} : vector<3x128xf32> to vector<1x128xf32>
    %c18 = arith.constant 18 : index
    %c0_4 = arith.constant 0 : index
    %10 = vector.load %arg3[%c18, %c0_4] : memref<40x128xf32, #tpu.memory_space<vmem>>, vector<1x128xf32>
    tpu.vector_store %arg3[%c18, %c0_4], %9 {strides = array<i32>} : memref<40x128xf32, #tpu.memory_space<vmem>>, vector<1x128xf32>,
    %11 = vector.extract_strided_slice %3 {offsets = [1, 0], sizes = [1, 128], strides = [1, 1]} : vector<3x128xf32> to vector<1x128xf32>
    %c6 = arith.constant 6 : index
    %c0_5 = arith.constant 0 : index
    %12 = vector.load %arg3[%c6, %c0_5] : memref<40x128xf32, #tpu.memory_space<vmem>>, vector<1x128xf32>
    tpu.vector_store %arg3[%c6, %c0_5], %11 {strides = array<i32>} : memref<40x128xf32, #tpu.memory_space<vmem>>, vector<1x128xf32>,
    %13 = vector.extract_strided_slice %6 {offsets = [1, 0], sizes = [1, 128], strides = [1, 1]} : vector<3x128xf32> to vector<1x128xf32>
    %c24 = arith.constant 24 : index
    %c0_6 = arith.constant 0 : index
    %14 = vector.load %arg3[%c24, %c0_6] : memref<40x128xf32, #tpu.memory_space<vmem>>, vector<1x128xf32>
    tpu.vector_store %arg3[%c24, %c0_6], %13 {strides = array<i32>} : memref<40x128xf32, #tpu.memory_space<vmem>>, vector<1x128xf32>,
    %15 = vector.extract_strided_slice %3 {offsets = [2, 0], sizes = [1, 128], strides = [1, 1]} : vector<3x128xf32> to vector<1x128xf32>
    %c12 = arith.constant 12 : index
    %c0_7 = arith.constant 0 : index
    %16 = vector.load %arg3[%c12, %c0_7] : memref<40x128xf32, #tpu.memory_space<vmem>>, vector<1x128xf32>
    tpu.vector_store %arg3[%c12, %c0_7], %15 {strides = array<i32>} : memref<40x128xf32, #tpu.memory_space<vmem>>, vector<1x128xf32>,
    %17 = vector.extract_strided_slice %6 {offsets = [2, 0], sizes = [1, 128], strides = [1, 1]} : vector<3x128xf32> to vector<1x128xf32>
    %c30 = arith.constant 30 : index
    %c0_8 = arith.constant 0 : index
    %18 = vector.load %arg3[%c30, %c0_8] : memref<40x128xf32, #tpu.memory_space<vmem>>, vector<1x128xf32>
    tpu.vector_store %arg3[%c30, %c0_8], %17 {strides = array<i32>} : memref<40x128xf32, #tpu.memory_space<vmem>>, vector<1x128xf32>,
    %cst_9 = arith.constant 2.000000e+00 : f32
    %19 = vector.broadcast %cst_9 : f32 to vector<3x128xf32>
    %20 = arith.mulf %19, %3 : vector<3x128xf32>
    %21 = arith.mulf %20, %6 : vector<3x128xf32>
    %22 = arith.subf %6, %3 : vector<3x128xf32>
    %23 = arith.addf %6, %3 : vector<3x128xf32>
    %24 = arith.mulf %22, %23 : vector<3x128xf32>
    %25 = vector.extract_strided_slice %21 {offsets = [0, 0], sizes = [1, 128], strides = [1, 1]} : vector<3x128xf32> to vector<1x128xf32>
    %c1 = arith.constant 1 : index
    %c0_10 = arith.constant 0 : index
    %26 = vector.load %arg3[%c1, %c0_10] : memref<40x128xf32, #tpu.memory_space<vmem>>, vector<1x128xf32>
    tpu.vector_store %arg3[%c1, %c0_10], %25 {strides = array<i32>} : memref<40x128xf32, #tpu.memory_space<vmem>>, vector<1x128xf32>,
    %27 = vector.extract_strided_slice %24 {offsets = [0, 0], sizes = [1, 128], strides = [1, 1]} : vector<3x128xf32> to vector<1x128xf32>
    %c19 = arith.constant 19 : index
    %c0_11 = arith.constant 0 : index
    %28 = vector.load %arg3[%c19, %c0_11] : memref<40x128xf32, #tpu.memory_space<vmem>>, vector<1x128xf32>
    tpu.vector_store %arg3[%c19, %c0_11], %27 {strides = array<i32>} : memref<40x128xf32, #tpu.memory_space<vmem>>, vector<1x128xf32>,
    %29 = vector.extract_strided_slice %21 {offsets = [1, 0], sizes = [1, 128], strides = [1, 1]} : vector<3x128xf32> to vector<1x128xf32>
    %c7 = arith.constant 7 : index
    %c0_12 = arith.constant 0 : index
    %30 = vector.load %arg3[%c7, %c0_12] : memref<40x128xf32, #tpu.memory_space<vmem>>, vector<1x128xf32>
    tpu.vector_store %arg3[%c7, %c0_12], %29 {strides = array<i32>} : memref<40x128xf32, #tpu.memory_space<vmem>>, vector<1x128xf32>,
    %31 = vector.extract_strided_slice %24 {offsets = [1, 0], sizes = [1, 128], strides = [1, 1]} : vector<3x128xf32> to vector<1x128xf32>
    %c25 = arith.constant 25 : index
    %c0_13 = arith.constant 0 : index
    %32 = vector.load %arg3[%c25, %c0_13] : memref<40x128xf32, #tpu.memory_space<vmem>>, vector<1x128xf32>
    tpu.vector_store %arg3[%c25, %c0_13], %31 {strides = array<i32>} : memref<40x128xf32, #tpu.memory_space<vmem>>, vector<1x128xf32>,
    %33 = vector.extract_strided_slice %21 {offsets = [2, 0], sizes = [1, 128], strides = [1, 1]} : vector<3x128xf32> to vector<1x128xf32>
    %c13 = arith.constant 13 : index
    %c0_14 = arith.constant 0 : index
    %34 = vector.load %arg3[%c13, %c0_14] : memref<40x128xf32, #tpu.memory_space<vmem>>, vector<1x128xf32>
    tpu.vector_store %arg3[%c13, %c0_14], %33 {strides = array<i32>} : memref<40x128xf32, #tpu.memory_space<vmem>>, vector<1x128xf32>,
    %35 = vector.extract_strided_slice %24 {offsets = [2, 0], sizes = [1, 128], strides = [1, 1]} : vector<3x128xf32> to vector<1x128xf32>
    %c31 = arith.constant 31 : index
    %c0_15 = arith.constant 0 : index
    %36 = vector.load %arg3[%c31, %c0_15] : memref<40x128xf32, #tpu.memory_space<vmem>>, vector<1x128xf32>
    tpu.vector_store %arg3[%c31, %c0_15], %35 {strides = array<i32>} : memref<40x128xf32, #tpu.memory_space<vmem>>, vector<1x128xf32>,
    %cst_16 = arith.constant 2.000000e+00 : f32
    %37 = vector.broadcast %cst_16 : f32 to vector<3x128xf32>
    %38 = arith.mulf %37, %21 : vector<3x128xf32>
    %39 = arith.mulf %38, %24 : vector<3x128xf32>
    %40 = arith.subf %24, %21 : vector<3x128xf32>
    %41 = arith.addf %24, %21 : vector<3x128xf32>
    %42 = arith.mulf %40, %41 : vector<3x128xf32>
    %43 = vector.extract_strided_slice %39 {offsets = [0, 0], sizes = [1, 128], strides = [1, 1]} : vector<3x128xf32> to vector<1x128xf32>
    %c2 = arith.constant 2 : index
    %c0_17 = arith.constant 0 : index
    %44 = vector.load %arg3[%c2, %c0_17] : memref<40x128xf32, #tpu.memory_space<vmem>>, vector<1x128xf32>
    tpu.vector_store %arg3[%c2, %c0_17], %43 {strides = array<i32>} : memref<40x128xf32, #tpu.memory_space<vmem>>, vector<1x128xf32>,
    %45 = vector.extract_strided_slice %42 {offsets = [0, 0], sizes = [1, 128], strides = [1, 1]} : vector<3x128xf32> to vector<1x128xf32>
    %c20 = arith.constant 20 : index
    %c0_18 = arith.constant 0 : index
    %46 = vector.load %arg3[%c20, %c0_18] : memref<40x128xf32, #tpu.memory_space<vmem>>, vector<1x128xf32>
    tpu.vector_store %arg3[%c20, %c0_18], %45 {strides = array<i32>} : memref<40x128xf32, #tpu.memory_space<vmem>>, vector<1x128xf32>,
    %47 = vector.extract_strided_slice %39 {offsets = [1, 0], sizes = [1, 128], strides = [1, 1]} : vector<3x128xf32> to vector<1x128xf32>
    %c8 = arith.constant 8 : index
    %c0_19 = arith.constant 0 : index
    %48 = vector.load %arg3[%c8, %c0_19] : memref<40x128xf32, #tpu.memory_space<vmem>>, vector<1x128xf32>
    tpu.vector_store %arg3[%c8, %c0_19], %47 {strides = array<i32>} : memref<40x128xf32, #tpu.memory_space<vmem>>, vector<1x128xf32>,
    %49 = vector.extract_strided_slice %42 {offsets = [1, 0], sizes = [1, 128], strides = [1, 1]} : vector<3x128xf32> to vector<1x128xf32>
    %c26 = arith.constant 26 : index
    %c0_20 = arith.constant 0 : index
    %50 = vector.load %arg3[%c26, %c0_20] : memref<40x128xf32, #tpu.memory_space<vmem>>, vector<1x128xf32>
    tpu.vector_store %arg3[%c26, %c0_20], %49 {strides = array<i32>} : memref<40x128xf32, #tpu.memory_space<vmem>>, vector<1x128xf32>,
    %51 = vector.extract_strided_slice %39 {offsets = [2, 0], sizes = [1, 128], strides = [1, 1]} : vector<3x128xf32> to vector<1x128xf32>
    %c14 = arith.constant 14 : index
    %c0_21 = arith.constant 0 : index
    %52 = vector.load %arg3[%c14, %c0_21] : memref<40x128xf32, #tpu.memory_space<vmem>>, vector<1x128xf32>
    tpu.vector_store %arg3[%c14, %c0_21], %51 {strides = array<i32>} : memref<40x128xf32, #tpu.memory_space<vmem>>, vector<1x128xf32>,
    %53 = vector.extract_strided_slice %42 {offsets = [2, 0], sizes = [1, 128], strides = [1, 1]} : vector<3x128xf32> to vector<1x128xf32>
    %c32 = arith.constant 32 : index
    %c0_22 = arith.constant 0 : index
    %54 = vector.load %arg3[%c32, %c0_22] : memref<40x128xf32, #tpu.memory_space<vmem>>, vector<1x128xf32>
    tpu.vector_store %arg3[%c32, %c0_22], %53 {strides = array<i32>} : memref<40x128xf32, #tpu.memory_space<vmem>>, vector<1x128xf32>,
    %cst_23 = arith.constant 2.000000e+00 : f32
    %55 = vector.broadcast %cst_23 : f32 to vector<3x128xf32>
    %56 = arith.mulf %55, %39 : vector<3x128xf32>
    %57 = arith.mulf %56, %42 : vector<3x128xf32>
    %58 = arith.subf %42, %39 : vector<3x128xf32>
    %59 = arith.addf %42, %39 : vector<3x128xf32>
    %60 = arith.mulf %58, %59 : vector<3x128xf32>
    %61 = vector.extract_strided_slice %57 {offsets = [0, 0], sizes = [1, 128], strides = [1, 1]} : vector<3x128xf32> to vector<1x128xf32>
    %c3 = arith.constant 3 : index
    %c0_24 = arith.constant 0 : index
    %62 = vector.load %arg3[%c3, %c0_24] : memref<40x128xf32, #tpu.memory_space<vmem>>, vector<1x128xf32>
    tpu.vector_store %arg3[%c3, %c0_24], %61 {strides = array<i32>} : memref<40x128xf32, #tpu.memory_space<vmem>>, vector<1x128xf32>,
    %63 = vector.extract_strided_slice %60 {offsets = [0, 0], sizes = [1, 128], strides = [1, 1]} : vector<3x128xf32> to vector<1x128xf32>
    %c21 = arith.constant 21 : index
    %c0_25 = arith.constant 0 : index
    %64 = vector.load %arg3[%c21, %c0_25] : memref<40x128xf32, #tpu.memory_space<vmem>>, vector<1x128xf32>
    tpu.vector_store %arg3[%c21, %c0_25], %63 {strides = array<i32>} : memref<40x128xf32, #tpu.memory_space<vmem>>, vector<1x128xf32>,
    %65 = vector.extract_strided_slice %57 {offsets = [1, 0], sizes = [1, 128], strides = [1, 1]} : vector<3x128xf32> to vector<1x128xf32>
    %c9 = arith.constant 9 : index
    %c0_26 = arith.constant 0 : index
    %66 = vector.load %arg3[%c9, %c0_26] : memref<40x128xf32, #tpu.memory_space<vmem>>, vector<1x128xf32>
    tpu.vector_store %arg3[%c9, %c0_26], %65 {strides = array<i32>} : memref<40x128xf32, #tpu.memory_space<vmem>>, vector<1x128xf32>,
    %67 = vector.extract_strided_slice %60 {offsets = [1, 0], sizes = [1, 128], strides = [1, 1]} : vector<3x128xf32> to vector<1x128xf32>
    %c27 = arith.constant 27 : index
    %c0_27 = arith.constant 0 : index
    %68 = vector.load %arg3[%c27, %c0_27] : memref<40x128xf32, #tpu.memory_space<vmem>>, vector<1x128xf32>
    tpu.vector_store %arg3[%c27, %c0_27], %67 {strides = array<i32>} : memref<40x128xf32, #tpu.memory_space<vmem>>, vector<1x128xf32>,
    %69 = vector.extract_strided_slice %57 {offsets = [2, 0], sizes = [1, 128], strides = [1, 1]} : vector<3x128xf32> to vector<1x128xf32>
    %c15 = arith.constant 15 : index
    %c0_28 = arith.constant 0 : index
    %70 = vector.load %arg3[%c15, %c0_28] : memref<40x128xf32, #tpu.memory_space<vmem>>, vector<1x128xf32>
    tpu.vector_store %arg3[%c15, %c0_28], %69 {strides = array<i32>} : memref<40x128xf32, #tpu.memory_space<vmem>>, vector<1x128xf32>,
    %71 = vector.extract_strided_slice %60 {offsets = [2, 0], sizes = [1, 128], strides = [1, 1]} : vector<3x128xf32> to vector<1x128xf32>
    %c33 = arith.constant 33 : index
    %c0_29 = arith.constant 0 : index
    %72 = vector.load %arg3[%c33, %c0_29] : memref<40x128xf32, #tpu.memory_space<vmem>>, vector<1x128xf32>
    tpu.vector_store %arg3[%c33, %c0_29], %71 {strides = array<i32>} : memref<40x128xf32, #tpu.memory_space<vmem>>, vector<1x128xf32>,
    %cst_30 = arith.constant 2.000000e+00 : f32
    %73 = vector.broadcast %cst_30 : f32 to vector<3x128xf32>
    %74 = arith.mulf %73, %57 : vector<3x128xf32>
    %75 = arith.mulf %74, %60 : vector<3x128xf32>
    %76 = arith.subf %60, %57 : vector<3x128xf32>
    %77 = arith.addf %60, %57 : vector<3x128xf32>
    %78 = arith.mulf %76, %77 : vector<3x128xf32>
    %79 = vector.extract_strided_slice %75 {offsets = [0, 0], sizes = [1, 128], strides = [1, 1]} : vector<3x128xf32> to vector<1x128xf32>
    %c4 = arith.constant 4 : index
    %c0_31 = arith.constant 0 : index
    %80 = vector.load %arg3[%c4, %c0_31] : memref<40x128xf32, #tpu.memory_space<vmem>>, vector<1x128xf32>
    tpu.vector_store %arg3[%c4, %c0_31], %79 {strides = array<i32>} : memref<40x128xf32, #tpu.memory_space<vmem>>, vector<1x128xf32>,
    %81 = vector.extract_strided_slice %78 {offsets = [0, 0], sizes = [1, 128], strides = [1, 1]} : vector<3x128xf32> to vector<1x128xf32>
    %c22 = arith.constant 22 : index
    %c0_32 = arith.constant 0 : index
    %82 = vector.load %arg3[%c22, %c0_32] : memref<40x128xf32, #tpu.memory_space<vmem>>, vector<1x128xf32>
    tpu.vector_store %arg3[%c22, %c0_32], %81 {strides = array<i32>} : memref<40x128xf32, #tpu.memory_space<vmem>>, vector<1x128xf32>,
    %83 = vector.extract_strided_slice %75 {offsets = [1, 0], sizes = [1, 128], strides = [1, 1]} : vector<3x128xf32> to vector<1x128xf32>
    %c10 = arith.constant 10 : index
    %c0_33 = arith.constant 0 : index
    %84 = vector.load %arg3[%c10, %c0_33] : memref<40x128xf32, #tpu.memory_space<vmem>>, vector<1x128xf32>
    tpu.vector_store %arg3[%c10, %c0_33], %83 {strides = array<i32>} : memref<40x128xf32, #tpu.memory_space<vmem>>, vector<1x128xf32>,
    %85 = vector.extract_strided_slice %78 {offsets = [1, 0], sizes = [1, 128], strides = [1, 1]} : vector<3x128xf32> to vector<1x128xf32>
    %c28 = arith.constant 28 : index
    %c0_34 = arith.constant 0 : index
    %86 = vector.load %arg3[%c28, %c0_34] : memref<40x128xf32, #tpu.memory_space<vmem>>, vector<1x128xf32>
    tpu.vector_store %arg3[%c28, %c0_34], %85 {strides = array<i32>} : memref<40x128xf32, #tpu.memory_space<vmem>>, vector<1x128xf32>,
    %87 = vector.extract_strided_slice %75 {offsets = [2, 0], sizes = [1, 128], strides = [1, 1]} : vector<3x128xf32> to vector<1x128xf32>
    %c16 = arith.constant 16 : index
    %c0_35 = arith.constant 0 : index
    %88 = vector.load %arg3[%c16, %c0_35] : memref<40x128xf32, #tpu.memory_space<vmem>>, vector<1x128xf32>
    tpu.vector_store %arg3[%c16, %c0_35], %87 {strides = array<i32>} : memref<40x128xf32, #tpu.memory_space<vmem>>, vector<1x128xf32>,
    %89 = vector.extract_strided_slice %78 {offsets = [2, 0], sizes = [1, 128], strides = [1, 1]} : vector<3x128xf32> to vector<1x128xf32>
    %c34 = arith.constant 34 : index
    %c0_36 = arith.constant 0 : index
    %90 = vector.load %arg3[%c34, %c0_36] : memref<40x128xf32, #tpu.memory_space<vmem>>, vector<1x128xf32>
    tpu.vector_store %arg3[%c34, %c0_36], %89 {strides = array<i32>} : memref<40x128xf32, #tpu.memory_space<vmem>>, vector<1x128xf32>,
    %cst_37 = arith.constant 2.000000e+00 : f32
    %91 = vector.broadcast %cst_37 : f32 to vector<3x128xf32>
    %92 = arith.mulf %91, %75 : vector<3x128xf32>
    %93 = arith.mulf %92, %78 : vector<3x128xf32>
    %94 = arith.subf %78, %75 : vector<3x128xf32>
    %95 = arith.addf %78, %75 : vector<3x128xf32>
    %96 = arith.mulf %94, %95 : vector<3x128xf32>
    %97 = vector.extract_strided_slice %93 {offsets = [0, 0], sizes = [1, 128], strides = [1, 1]} : vector<3x128xf32> to vector<1x128xf32>
    %c5 = arith.constant 5 : index
    %c0_38 = arith.constant 0 : index
    %98 = vector.load %arg3[%c5, %c0_38] : memref<40x128xf32, #tpu.memory_space<vmem>>, vector<1x128xf32>
    tpu.vector_store %arg3[%c5, %c0_38], %97 {strides = array<i32>} : memref<40x128xf32, #tpu.memory_space<vmem>>, vector<1x128xf32>,
    %99 = vector.extract_strided_slice %96 {offsets = [0, 0], sizes = [1, 128], strides = [1, 1]} : vector<3x128xf32> to vector<1x128xf32>
    %c23 = arith.constant 23 : index
    %c0_39 = arith.constant 0 : index
    %100 = vector.load %arg3[%c23, %c0_39] : memref<40x128xf32, #tpu.memory_space<vmem>>, vector<1x128xf32>
    tpu.vector_store %arg3[%c23, %c0_39], %99 {strides = array<i32>} : memref<40x128xf32, #tpu.memory_space<vmem>>, vector<1x128xf32>,
    %101 = vector.extract_strided_slice %93 {offsets = [1, 0], sizes = [1, 128], strides = [1, 1]} : vector<3x128xf32> to vector<1x128xf32>
    %c11 = arith.constant 11 : index
    %c0_40 = arith.constant 0 : index
    %102 = vector.load %arg3[%c11, %c0_40] : memref<40x128xf32, #tpu.memory_space<vmem>>, vector<1x128xf32>
    tpu.vector_store %arg3[%c11, %c0_40], %101 {strides = array<i32>} : memref<40x128xf32, #tpu.memory_space<vmem>>, vector<1x128xf32>,
    %103 = vector.extract_strided_slice %96 {offsets = [1, 0], sizes = [1, 128], strides = [1, 1]} : vector<3x128xf32> to vector<1x128xf32>
    %c29 = arith.constant 29 : index
    %c0_41 = arith.constant 0 : index
    %104 = vector.load %arg3[%c29, %c0_41] : memref<40x128xf32, #tpu.memory_space<vmem>>, vector<1x128xf32>
    tpu.vector_store %arg3[%c29, %c0_41], %103 {strides = array<i32>} : memref<40x128xf32, #tpu.memory_space<vmem>>, vector<1x128xf32>,
    %105 = vector.extract_strided_slice %93 {offsets = [2, 0], sizes = [1, 128], strides = [1, 1]} : vector<3x128xf32> to vector<1x128xf32>
    %c17 = arith.constant 17 : index
    %c0_42 = arith.constant 0 : index
    %106 = vector.load %arg3[%c17, %c0_42] : memref<40x128xf32, #tpu.memory_space<vmem>>, vector<1x128xf32>
    tpu.vector_store %arg3[%c17, %c0_42], %105 {strides = array<i32>} : memref<40x128xf32, #tpu.memory_space<vmem>>, vector<1x128xf32>,
    %107 = vector.extract_strided_slice %96 {offsets = [2, 0], sizes = [1, 128], strides = [1, 1]} : vector<3x128xf32> to vector<1x128xf32>
    %c35 = arith.constant 35 : index
    %c0_43 = arith.constant 0 : index
    %108 = vector.load %arg3[%c35, %c0_43] : memref<40x128xf32, #tpu.memory_space<vmem>>, vector<1x128xf32>
    tpu.vector_store %arg3[%c35, %c0_43], %107 {strides = array<i32>} : memref<40x128xf32, #tpu.memory_space<vmem>>, vector<1x128xf32>,
    %c36 = arith.constant 36 : index
    %c0_44 = arith.constant 0 : index
    %109 = vector.load %arg3[%c36, %c0_44] : memref<40x128xf32, #tpu.memory_space<vmem>>, vector<3x128xf32>
    tpu.vector_store %arg3[%c36, %c0_44], %0 {strides = array<i32>} : memref<40x128xf32, #tpu.memory_space<vmem>>, vector<3x128xf32>,
    %cst_45 = arith.constant 0.000000e+00 : f32
    %110 = vector.broadcast %cst_45 : f32 to vector<1x128xf32>
    %c39 = arith.constant 39 : index
    %c0_46 = arith.constant 0 : index
    %111 = vector.load %arg3[%c39, %c0_46] : memref<40x128xf32, #tpu.memory_space<vmem>>, vector<1x128xf32>
    tpu.vector_store %arg3[%c39, %c0_46], %110 {strides = array<i32>} : memref<40x128xf32, #tpu.memory_space<vmem>>, vector<1x128xf32>,
    %c0_47 = arith.constant 0 : index
    %c0_48 = arith.constant 0 : index
    %112 = vector.load %arg3[%c0_47, %c0_48] : memref<40x128xf32, #tpu.memory_space<vmem>>, vector<40x128xf32>
    %113 = tpu.transpose %112, [1, 0] : vector<40x128xf32> -> vector<128x40xf32>
    %114 = vector.extract_strided_slice %113 {offsets = [0, 0], sizes = [128, 39], strides = [1, 1]} : vector<128x40xf32> to vector<128x39xf32>
    %c0_49 = arith.constant 0 : index
    %c0_50 = arith.constant 0 : index
    %115 = vector.load %arg2[%c0_49, %c0_50] : memref<128x39xf32, #tpu.memory_space<vmem>>, vector<128x39xf32>
    tpu.vector_store %arg2[%c0_49, %c0_50], %114 {strides = array<i32>} : memref<128x39xf32, #tpu.memory_space<vmem>>, vector<128x39xf32>,
    return
  }
  func.func @transform_0(%arg0: i32) -> (i32, i32) {
    %c0_i32 = arith.constant 0 : i32
    %c0_i32_0 = arith.constant 0 : i32
    return %c0_i32, %arg0 : i32, i32
  }
  func.func @transform_1(%arg0: i32) -> (i32, i32) {
    %c0_i32 = arith.constant 0 : i32
    %c0_i32_0 = arith.constant 0 : i32
    return %arg0, %c0_i32 : i32, i32
  }
}

</mosaic_0001>

<llo_original>
// kernel: tpu_custom_call.1
$region0: #{tpu_custom_call.1}
  #allocation0 [shape = 'u32[]', space=smem, size = 0x4, offset = 0x4, fixed_abs, tag = 'smem constant byte address 0x4 - core index']
  #allocation1 [shape = 'u32[144,128]{1,0:T(1,128)}', space=vmem, size = 0x12000, scoped, tag = 'internal scratch']
  #allocation2 [shape = 'f32[40,128]{1,0:T(8,128)}', space=vmem, size = 0x5000, scoped, tag = 'scratch operand']
  %s0 = inlined_call_operand.hbm [shape: f32[3,32], index: 0, kind: input, shape index: {}]
  %s1 = inlined_call_operand.hbm [shape: f32[32,39], index: 1, kind: output, shape index: {}]
  %s2 = sld [smem:[#allocation0]]
  $region18: #{tpu_custom_call.1} parent=0
    _
  %s4 = ssub.s32 1, %s2
  %s5 = scalar_select 0, %s4, %s2
  $region1: #{tpu_custom_call.1} parent=0
    #allocation3 [shape = 'u8[2048]{0}', space=vmem, size = 0x800, scoped, tag = 'input window, operand 0, single buffered']
    #allocation4 [shape = 's32[1]{0}', space=sflag, size = 0x4, scoped, tag = 'scoped memory for tpu_custom_call.1']
    #allocation5 [shape = 's32[1]{0}', space=sflag, size = 0x4, scoped, tag = 'scoped memory for tpu_custom_call.1']
    #allocation6 [shape = 'u8[65536]{0}', space=vmem, size = 0x10000, scoped, tag = 'output window, operand 0, single buffered']
    %6 = vsyncpa [#allocation4], 0
    %7 = vsyncpa [#allocation5], 0
    // Predicated region
    $region2: #{tpu_custom_call.1} parent=1 // pred_check
      _
    $region3: #{tpu_custom_call.1} parent=1 // pred_check_branch
      %9 = sbr.rel (0) target = $region5
    $region4: #{tpu_custom_call.1} parent=1 // pred_region
      %s11 = ssub.s32 64, 64
      %12 = vsyncadd [#allocation4], %s11
      %s14 = sshll.u32 [#allocation3], 4
      %s15 = int_to_ptr.vmem [resolvable:$true] %s14
      %17 = dma.hbm_to_vmem [thread:$0]  %s0, 64, %s15, [#allocation4]
    $region5: #{tpu_custom_call.1} parent=1 // pred_fallthru
      _
    // Predicated region
    $region6: #{tpu_custom_call.1} parent=1 // pred_check
      _
    $region7: #{tpu_custom_call.1} parent=1 // pred_check_branch
      %19 = sbr.rel (0) target = $region9
    $region8: #{tpu_custom_call.1} parent=1 // pred_region
      %20 = dma.done [#allocation4], 64
    $region9: #{tpu_custom_call.1} parent=1 // pred_fallthru
      _
    %v21 = vld [vmem:[#allocation3] sm:$0x7]
    %v22 = vand.u32 2147483647, %v21
    %vm23 = vcmp.le.f32.partialorder %v22, 0.7853982
    %vm24 = vcmp.lt.s32.totalorder %v21, 0
    %v25 = vand.u32 %v21, 2139095040
    %v26 = vshrl.u32 %v25, 23
    %v27 = vsub.s32 %v26, 127
    %v28 = vand.u32 2147483647, %v21
    %v29 = vand.u32 %v28, 8388607
    %v30 = vor.u32 %v29, 8388608
    %v31 = vsub.s32 0, %v30
    %v32 = vadd.s32 %v27, 1
    %vm33 = vcmp.gt.s32.totalorder %v32, 0
    %v34 = vsel %vm33, %v32, 0
    %v35 = vshrl.u32 %v34, 5
    %v36 = vand.u32 %v34, 31
    %v37 = vsub.s32 32, %v36
    %v38 = vshrl.u32 683565275, %v37
    %v39 = vshll.u32 683565275, %v36
    %v40 = vshrl.u32 2475754826, %v37
    %v41 = vor.u32 %v39, %v40
    %v42 = vshll.u32 2475754826, %v36
    %v43 = vshrl.u32 2131351028, %v37
    %v44 = vor.u32 %v42, %v43
    %v45 = vshll.u32 2131351028, %v36
    %v46 = vshrl.u32 2102212464, %v37
    %v47 = vor.u32 %v45, %v46
    %v48 = vshll.u32 2102212464, %v36
    %v49 = vshrl.u32 920167782, %v37
    %v50 = vor.u32 %v48, %v49
    %v51 = vshll.u32 920167782, %v36
    %v52 = vshrl.u32 1326507024, %v37
    %v53 = vor.u32 %v51, %v52
    %vm54 = vcmp.lt.s32.totalorder %v35, 1
    %vm55 = vcmp.lt.s32.totalorder %v35, 2
    %vm56 = vcmp.lt.s32.totalorder %v35, 3
    %vm57 = vcmp.lt.s32.totalorder %v35, 4
    %v58 = vsel %vm54, %v38, %v41
    %v59 = vsel %vm57, %v47, 2102212464
    %v60 = vsel %vm56, %v44, %v59
    %v61 = vsel %vm55, %v58, %v60
    %v62 = vsel %vm54, %v41, %v44
    %v63 = vsel %vm57, %v50, 920167782
    %v64 = vsel %vm56, %v47, %v63
    %v65 = vsel %vm55, %v62, %v64
    %v66 = vsel %vm54, %v44, %v47
    %v67 = vsel %vm57, %v53, 1326507024
    %v68 = vsel %vm56, %v50, %v67
    %v69 = vsel %vm55, %v66, %v68
    %v70 = vshll.u32 %v30, 8
    %v71 = vmul.u32.u64.compose %v70, %v69
    %v72 = vextract.low.u32 %v71
    %v73 = vextract.high.u32 %v71
    %v74 = vmul.u32.u64.compose %v70, %v65
    %v75 = vextract.low.u32 %v74
    %v76 = vextract.high.u32 %v74
    %v77 = vmul.u32 %v70, %v61
    %v78 = vadd.s32 %v73, %v75
    %vm79 = vc.u32 %v73, %v75
    %v80 = vadd.s32 %v76, 1
    %v81 = vsel %vm79, %v80, %v76
    %v82 = vadd.s32 %v77, %v81
    %v83 = vadd.s32 %v82, 536870912
    %v84 = vshrl.u32 %v83, 30
    %v85 = vshll.u32 %v84, 30
    %v86 = vsub.s32 %v82, %v85
    %vm87 = vcmp.lt.s32.totalorder %v86, 0
    %v88 = vsub.s32 0, %v86
    %v89 = vsel %vm87, %v88, %v86
    %v90 = vclz %v89
    %v91 = vsub.s32 %v90, 2
    %vm92 = vcmp.gt.s32.totalorder 0, %v91
    %v93 = vsel %vm92, 0, %v91
    %v94 = vsub.s32 32, %v93
    %v95 = vshll.u32 %v86, %v93
    %v96 = vshrl.u32 %v78, %v94
    %v97 = vor.u32 %v95, %v96
    %v98 = vsub.s32 4294967266, %v93
    %v99 = vadd.s32 %v98, 127
    %v100 = vshll.u32 %v99, 23
    %v101 = vor.u32 4788187, %v100
    %v102 = vand.u32 2147483647, %v101
    %v104 = vcvt.s32.f32 %v97
    %v105 = vmul.f32 %v104, %v102
    %v106 = vxor.u32 %v105, 2147483648
    %v107 = vsel %vm24, %v106, %v105
    %v108 = vsub.s32 4, %v84
    %v109 = vsel %vm24, %v108, %v84
    %v110 = vsel %vm23, %v21, %v107
    %v111 = vsel %vm23, 0, %v109
    %v112 = vcosq.f32.pop %v110
    %v113 = vsinq.f32.pop %v110
    %vm114 = vweird.f32 %v21
    %v115 = vadd.s32 %v111, 3
    %v116 = vand.u32 %v115, 3
    %vm117 = vcmp.lt.s32.totalorder %v116, 2
    %vm118 = vcmp.eq.s32.totalorder %v116, 0
    %v119 = vxor.u32 %v113, 2147483648
    %v120 = vsel %vm118, %v112, %v119
    %vm121 = vcmp.eq.s32.totalorder %v116, 2
    %v122 = vxor.u32 %v112, 2147483648
    %v123 = vsel %vm121, %v122, %v113
    %v124 = vsel %vm117, %v120, %v123
    %v125 = vsel %vm114, nan, %v124
    %v126 = vand.u32 2147483647, %v21
    %vm127 = vcmp.le.f32.partialorder %v126, 0.7853982
    %vm128 = vcmp.lt.s32.totalorder %v21, 0
    %v129 = vand.u32 %v21, 2139095040
    %v130 = vshrl.u32 %v129, 23
    %v131 = vsub.s32 %v130, 127
    %v132 = vand.u32 2147483647, %v21
    %v133 = vand.u32 %v132, 8388607
    %v134 = vor.u32 %v133, 8388608
    %v135 = vsub.s32 0, %v134
    %v136 = vadd.s32 %v131, 1
    %vm137 = vcmp.gt.s32.totalorder %v136, 0
    %v138 = vsel %vm137, %v136, 0
    %v139 = vshrl.u32 %v138, 5
    %v140 = vand.u32 %v138, 31
    %v141 = vsub.s32 32, %v140
    %v142 = vshrl.u32 683565275, %v141
    %v143 = vshll.u32 683565275, %v140
    %v144 = vshrl.u32 2475754826, %v141
    %v145 = vor.u32 %v143, %v144
    %v146 = vshll.u32 2475754826, %v140
    %v147 = vshrl.u32 2131351028, %v141
    %v148 = vor.u32 %v146, %v147
    %v149 = vshll.u32 2131351028, %v140
    %v150 = vshrl.u32 2102212464, %v141
    %v151 = vor.u32 %v149, %v150
    %v152 = vshll.u32 2102212464, %v140
    %v153 = vshrl.u32 920167782, %v141
    %v154 = vor.u32 %v152, %v153
    %v155 = vshll.u32 920167782, %v140
    %v156 = vshrl.u32 1326507024, %v141
    %v157 = vor.u32 %v155, %v156
    %vm158 = vcmp.lt.s32.totalorder %v139, 1
    %vm159 = vcmp.lt.s32.totalorder %v139, 2
    %vm160 = vcmp.lt.s32.totalorder %v139, 3
    %vm161 = vcmp.lt.s32.totalorder %v139, 4
    %v162 = vsel %vm158, %v142, %v145
    %v163 = vsel %vm161, %v151, 2102212464
    %v164 = vsel %vm160, %v148, %v163
    %v165 = vsel %vm159, %v162, %v164
    %v166 = vsel %vm158, %v145, %v148
    %v167 = vsel %vm161, %v154, 920167782
    %v168 = vsel %vm160, %v151, %v167
    %v169 = vsel %vm159, %v166, %v168
    %v170 = vsel %vm158, %v148, %v151
    %v171 = vsel %vm161, %v157, 1326507024
    %v172 = vsel %vm160, %v154, %v171
    %v173 = vsel %vm159, %v170, %v172
    %v174 = vshll.u32 %v134, 8
    %v175 = vmul.u32.u64.compose %v174, %v173
    %v176 = vextract.low.u32 %v175
    %v177 = vextract.high.u32 %v175
    %v178 = vmul.u32.u64.compose %v174, %v169
    %v179 = vextract.low.u32 %v178
    %v180 = vextract.high.u32 %v178
    %v181 = vmul.u32 %v174, %v165
    %v182 = vadd.s32 %v177, %v179
    %vm183 = vc.u32 %v177, %v179
    %v184 = vadd.s32 %v180, 1
    %v185 = vsel %vm183, %v184, %v180
    %v186 = vadd.s32 %v181, %v185
    %v187 = vadd.s32 %v186, 536870912
    %v188 = vshrl.u32 %v187, 30
    %v189 = vshll.u32 %v188, 30
    %v190 = vsub.s32 %v186, %v189
    %vm191 = vcmp.lt.s32.totalorder %v190, 0
    %v192 = vsub.s32 0, %v190
    %v193 = vsel %vm191, %v192, %v190
    %v194 = vclz %v193
    %v195 = vsub.s32 %v194, 2
    %vm196 = vcmp.gt.s32.totalorder 0, %v195
    %v197 = vsel %vm196, 0, %v195
    %v198 = vsub.s32 32, %v197
    %v199 = vshll.u32 %v190, %v197
    %v200 = vshrl.u32 %v182, %v198
    %v201 = vor.u32 %v199, %v200
    %v202 = vsub.s32 4294967266, %v197
    %v203 = vadd.s32 %v202, 127
    %v204 = vshll.u32 %v203, 23
    %v205 = vor.u32 4788187, %v204
    %v206 = vand.u32 2147483647, %v205
    %v208 = vcvt.s32.f32 %v201
    %v209 = vmul.f32 %v208, %v206
    %v210 = vxor.u32 %v209, 2147483648
    %v211 = vsel %vm128, %v210, %v209
    %v212 = vsub.s32 4, %v188
    %v213 = vsel %vm128, %v212, %v188
    %v214 = vsel %vm127, %v21, %v211
    %v215 = vsel %vm127, 0, %v213
    %v216 = vcosq.f32.pop %v214
    %v217 = vsinq.f32.pop %v214
    %vm218 = vweird.f32 %v21
    %v219 = vand.u32 %v215, 3
    %vm220 = vcmp.lt.s32.totalorder %v219, 2
    %vm221 = vcmp.eq.s32.totalorder %v219, 0
    %v222 = vxor.u32 %v217, 2147483648
    %v223 = vsel %vm221, %v216, %v222
    %vm224 = vcmp.eq.s32.totalorder %v219, 2
    %v225 = vxor.u32 %v216, 2147483648
    %v226 = vsel %vm224, %v225, %v217
    %v227 = vsel %vm220, %v223, %v226
    %v228 = vsel %vm218, nan, %v227
    %229 = vst [vmem:[#allocation2] sm:$0x1] %v125
    %230 = vst [vmem:[#allocation2 + $0x12] sm:$0x1] %v228
    %231 = vst [vmem:[#allocation2 + $0x5] sm:$0x2] %v125
    %232 = vst [vmem:[#allocation2 + $0x17] sm:$0x2] %v228
    %233 = vst [vmem:[#allocation2 + $0xa] sm:$0x4] %v125
    %234 = vst [vmem:[#allocation2 + $0x1c] sm:$0x4] %v228
    %v235 = vmul.f32 %v125, 2.0
    %v236 = vmul.f32 %v235, %v228
    %v237 = vsub.f32 %v228, %v125
    %v238 = vadd.f32 %v228, %v125
    %v239 = vmul.f32 %v237, %v238
    %240 = vst [vmem:[#allocation2 + $0x1] sm:$0x1] %v236
    %241 = vst [vmem:[#allocation2 + $0x13] sm:$0x1] %v239
    %242 = vst [vmem:[#allocation2 + $0x6] sm:$0x2] %v236
    %243 = vst [vmem:[#allocation2 + $0x18] sm:$0x2] %v239
    %244 = vst [vmem:[#allocation2 + $0xb] sm:$0x4] %v236
    %245 = vst [vmem:[#allocation2 + $0x1d] sm:$0x4] %v239
    %v246 = vmul.f32 %v236, 2.0
    %v247 = vmul.f32 %v246, %v239
    %v248 = vsub.f32 %v239, %v236
    %v249 = vadd.f32 %v239, %v236
    %v250 = vmul.f32 %v248, %v249
    %251 = vst [vmem:[#allocation2 + $0x2] sm:$0x1] %v247
    %252 = vst [vmem:[#allocation2 + $0x14] sm:$0x1] %v250
    %253 = vst [vmem:[#allocation2 + $0x7] sm:$0x2] %v247
    %254 = vst [vmem:[#allocation2 + $0x19] sm:$0x2] %v250
    %255 = vst [vmem:[#allocation2 + $0xc] sm:$0x4] %v247
    %256 = vst [vmem:[#allocation2 + $0x1e] sm:$0x4] %v250
    %v257 = vmul.f32 %v247, 2.0
    %v258 = vmul.f32 %v257, %v250
    %v259 = vsub.f32 %v250, %v247
    %v260 = vadd.f32 %v250, %v247
    %v261 = vmul.f32 %v259, %v260
    %262 = vst [vmem:[#allocation2 + $0x3] sm:$0x1] %v258
    %263 = vst [vmem:[#allocation2 + $0x15] sm:$0x1] %v261
    %264 = vst [vmem:[#allocation2 + $0x8] sm:$0x2] %v258
    %265 = vst [vmem:[#allocation2 + $0x1a] sm:$0x2] %v261
    %266 = vst [vmem:[#allocation2 + $0xd] sm:$0x4] %v258
    %267 = vst [vmem:[#allocation2 + $0x1f] sm:$0x4] %v261
    %v268 = vmul.f32 %v258, 2.0
    %v269 = vmul.f32 %v268, %v261
    %v270 = vsub.f32 %v261, %v258
    %v271 = vadd.f32 %v261, %v258
    %v272 = vmul.f32 %v270, %v271
    %273 = vst [vmem:[#allocation2 + $0x4] sm:$0x1] %v269
    %274 = vst [vmem:[#allocation2 + $0x16] sm:$0x1] %v272
    %275 = vst [vmem:[#allocation2 + $0x9] sm:$0x2] %v269
    %276 = vst [vmem:[#allocation2 + $0x1b] sm:$0x2] %v272
    %277 = vst [vmem:[#allocation2 + $0xe] sm:$0x4] %v269
    %278 = vst [vmem:[#allocation2 + $0x20] sm:$0x4] %v272
    %v279 = vmul.f32 %v269, 2.0
    %v280 = vmul.f32 %v279, %v272
    %v281 = vsub.f32 %v272, %v269
    %v282 = vadd.f32 %v272, %v269
    %v283 = vmul.f32 %v281, %v282
    %284 = vst [vmem:[#allocation2 + $0x5] sm:$0x1] %v280
    %285 = vst [vmem:[#allocation2 + $0x17] sm:$0x1] %v283
    %286 = vst [vmem:[#allocation2 + $0xa] sm:$0x2] %v280
    %287 = vst [vmem:[#allocation2 + $0x1c] sm:$0x2] %v283
    %288 = vst [vmem:[#allocation2 + $0xf] sm:$0x4] %v280
    %289 = vst [vmem:[#allocation2 + $0x21] sm:$0x4] %v283
    %290 = vst [vmem:[#allocation2 + $0x24] sm:$0x7] %v21
    %291 = vst [vmem:[#allocation2 + $0x27] sm:$0x1] 0.0
    %v292 = vld [vmem:[#allocation2] sm:$0xff]
    %v293 = vld [vmem:[#allocation2 + $0x8] sm:$0xff]
    %v294 = vld [vmem:[#allocation2 + $0x10] sm:$0xff]
    %v295 = vld [vmem:[#allocation2 + $0x18] sm:$0xff]
    %v296 = vld [vmem:[#allocation2 + $0x20] sm:$0xff]
    %297 = vxpose.xlu0.b32.start [1/16] %v292, 128
    %298 = vxpose.xlu0.b32.cont [2/16] %v293, 128
    %299 = vxpose.xlu0.b32.cont [3/16] %v294, 128
    %300 = vxpose.xlu0.b32.cont [4/16] %v295, 128
    %301 = vxpose.xlu0.b32.cont [5/16] %v296, 128
    %302 = vxpose.xlu0.b32.cont [6/16] 0.0, 128
    %303 = vxpose.xlu0.b32.cont [7/16] 0.0, 128
    %304 = vxpose.xlu0.b32.cont [8/16] 0.0, 128
    %305 = vxpose.xlu0.b32.cont [9/16] 0.0, 128
    %306 = vxpose.xlu0.b32.cont [10/16] 0.0, 128
    %307 = vxpose.xlu0.b32.cont [11/16] 0.0, 128
    %308 = vxpose.xlu0.b32.cont [12/16] 0.0, 128
    %309 = vxpose.xlu0.b32.cont [13/16] 0.0, 128
    %310 = vxpose.xlu0.b32.cont [14/16] 0.0, 128
    %311 = vxpose.xlu0.b32.cont [15/16] 0.0, 128
    %312 = vxpose.xlu0.b32.end [16/16] 0.0, 128
    %v313 = vpop.trf.xlu0
    %v314 = vpop.trf.xlu0
    %v315 = vpop.trf.xlu0
    %v316 = vpop.trf.xlu0
    %v317 = vpop.trf.xlu0
    %v318 = vpop.trf.xlu0
    %v319 = vpop.trf.xlu0
    %v320 = vpop.trf.xlu0
    %v321 = vpop.trf.xlu0
    %v322 = vpop.trf.xlu0
    %v323 = vpop.trf.xlu0
    %v324 = vpop.trf.xlu0
    %v325 = vpop.trf.xlu0
    %v326 = vpop.trf.xlu0
    %v327 = vpop.trf.xlu0
    %v328 = vpop.trf.xlu0
    %vm329 = vcmask 318464
    %330 = vst.msk [vmem:[#allocation6] sm:$0xff] %vm329, %v313
    %331 = vst.msk [vmem:[#allocation6 + $0x8] sm:$0xff] %vm329, %v314
    %332 = vst.msk [vmem:[#allocation6 + $0x10] sm:$0xff] %vm329, %v315
    %333 = vst.msk [vmem:[#allocation6 + $0x18] sm:$0xff] %vm329, %v316
    %334 = vst.msk [vmem:[#allocation6 + $0x20] sm:$0xff] %vm329, %v317
    %335 = vst.msk [vmem:[#allocation6 + $0x28] sm:$0xff] %vm329, %v318
    %336 = vst.msk [vmem:[#allocation6 + $0x30] sm:$0xff] %vm329, %v319
    %337 = vst.msk [vmem:[#allocation6 + $0x38] sm:$0xff] %vm329, %v320
    %338 = vst.msk [vmem:[#allocation6 + $0x40] sm:$0xff] %vm329, %v321
    %339 = vst.msk [vmem:[#allocation6 + $0x48] sm:$0xff] %vm329, %v322
    %340 = vst.msk [vmem:[#allocation6 + $0x50] sm:$0xff] %vm329, %v323
    %341 = vst.msk [vmem:[#allocation6 + $0x58] sm:$0xff] %vm329, %v324
    %342 = vst.msk [vmem:[#allocation6 + $0x60] sm:$0xff] %vm329, %v325
    %343 = vst.msk [vmem:[#allocation6 + $0x68] sm:$0xff] %vm329, %v326
    %344 = vst.msk [vmem:[#allocation6 + $0x70] sm:$0xff] %vm329, %v327
    %345 = vst.msk [vmem:[#allocation6 + $0x78] sm:$0xff] %vm329, %v328
    // Predicated region
    $region10: #{tpu_custom_call.1} parent=1 // pred_check
      _
    $region11: #{tpu_custom_call.1} parent=1 // pred_check_branch
      %347 = sbr.rel (0) target = $region13
    $region12: #{tpu_custom_call.1} parent=1 // pred_region
      %s349 = ssub.s32 2048, 512
      %350 = vsyncadd [#allocation5], %s349
      %s351 = sshll.u32 [#allocation6], 4
      %s352 = int_to_ptr.vmem [resolvable:$true] %s351
      %357 = dma.vmem_to_hbm [thread:$0]  %s352, 512, %s1, [#allocation5], 128, 128, 8
    $region13: #{tpu_custom_call.1} parent=1 // pred_fallthru
      _
    // Predicated region
    $region14: #{tpu_custom_call.1} parent=1 // pred_check
      _
    $region15: #{tpu_custom_call.1} parent=1 // pred_check_branch
      %359 = sbr.rel (0) target = $region17
    $region16: #{tpu_custom_call.1} parent=1 // pred_region
      %360 = dma.done [#allocation5], 2048
    $region17: #{tpu_custom_call.1} parent=1 // pred_fallthru
      _
    %361 = vsyncpa [#allocation4], 1
    %362 = vsyncpa [#allocation5], 1

</llo_original>
